<compile_context>
chip_gen: v5e
topology: v5e:2x2
jax: 0.10.0
libtpu: 0.0.40
codegen_flags: <defaults>
</compile_context>

<pallas_src>
import functools

import jax
import jax.numpy as jnp
from jax import lax
from jax.experimental import pallas as pl
from jax.experimental.pallas import tpu as pltpu

LANES = 128
PAD_LOGIT = -100.0  # focal(x=-100, t=0) == 0 (to f32 precision) -> neutral pad


def _round_up(a, b):
    return -(-a // b) * b


def _device_kind():
    try:
        return jax.devices()[0].device_kind.lower()
    except Exception:
        return ""


def _num_cores_and_max_tm():
    kind = _device_kind()
    ncores = 2 if "v7" in kind else 1                   # 2 TCs only on v7x
    max_tm = 4096 if ("v7" in kind or "v6" in kind) else 2048
    return ncores, max_tm


def _focal_elementwise(x, t, alpha, gamma):
    # Stable BCE-with-logits (matches torch binary_cross_entropy_with_logits):
    #   bce = max(x, 0) - x*t + log1p(exp(-|x|))
    e = jnp.exp(-jnp.abs(x))
    bce = jnp.maximum(x, 0.0) - x * t + jnp.log1p(e)
    pt = jnp.exp(-bce)
    w = 1.0 - pt
    g = float(gamma)
    if g.is_integer() and 0.0 <= g <= 8.0:
        gi = int(g)
        if gi == 0:
            weight = jnp.ones_like(bce)
        else:
            weight = w
            for _ in range(gi - 1):      # unrolled at trace time (gamma=2 -> w*w)
                weight = weight * w
    else:
        weight = w ** g                  # general (fractional) gamma
    return alpha * weight * bce


def _focal_reduce_kernel(x_ref, t_ref, out_ref, acc_ref, *,
                         alpha, gamma, rows, tm, bpc, mask_rows):
    c = pl.program_id(0)
    i = pl.program_id(1)

    @pl.when(i == 0)
    def _():
        acc_ref[...] = jnp.zeros_like(acc_ref)

    x = x_ref[...].astype(jnp.float32)
    t = t_ref[...].astype(jnp.float32)
    focal = _focal_elementwise(x, t, alpha, gamma)

    if mask_rows:
        # Row offset of this block (unclamped: the duplicate block on the last
        # core, if any, gets rows_left <= 0 and contributes exactly zero).
        rows_left = rows - (c * bpc + i) * tm

        @pl.when(rows_left >= tm)
        def _():
            acc_ref[...] += focal

        @pl.when(rows_left < tm)
        def _():
            rid = lax.broadcasted_iota(jnp.int32, focal.shape, 0)
            acc_ref[...] += jnp.where(rid < rows_left, focal, 0.0)
    else:
        acc_ref[...] += focal

    @pl.when(i == pl.num_programs(1) - 1)
    def _():
        # One cross-lane reduce per core, once per kernel.
        out_ref[0, 0] = jnp.sum(acc_ref[...])


def _focal_none_kernel(x_ref, t_ref, o_ref, *, alpha, gamma):
    x = x_ref[...].astype(jnp.float32)
    t = t_ref[...].astype(jnp.float32)
    o_ref[...] = _focal_elementwise(x, t, alpha, gamma).astype(o_ref.dtype)


def focal_loss(inputs, targets, alpha=1.0, gamma=2.0, reduction="mean"):
    """JAX/Pallas equivalent of FocalLoss.forward(inputs, targets)."""
    assert inputs.shape == targets.shape
    orig_shape = inputs.shape
    n = 1
    for d in orig_shape:
        n *= d

    ncores, max_tm = _num_cores_and_max_tm()

    x = inputs.reshape(-1)
    t = targets.reshape(-1)

    pad = (-n) % LANES
    if pad:
        # Rare fallback (n not a multiple of 128): neutral padding so the extra
        # elements contribute ~0 to the loss.  Common case: no copy at all.
        x = jnp.pad(x, (0, pad), constant_values=PAD_LOGIT)
        t = jnp.pad(t, (0, pad), constant_values=0)
    rows = (n + pad) // LANES
    x = x.reshape(rows, LANES)
    t = t.reshape(rows, LANES)

    # Tile height: one block per core for small/medium inputs, capped for big.
    tm = min(max_tm, max(8, _round_up(pl.cdiv(rows, ncores), 8)))
    nblocks = pl.cdiv(rows, tm)
    in_bytes = x.dtype.itemsize + t.dtype.itemsize

    if reduction in ("mean", "sum"):
        bpc = pl.cdiv(nblocks, ncores)     # blocks per core
        if ncores * bpc == nblocks:
            idx_map = lambda c, i: (c * bpc + i, 0)
        else:
            # One duplicate (fully masked) block on the last core.
            idx_map = lambda c, i: (jnp.minimum(c * bpc + i, nblocks - 1), 0)
        mask_rows = (ncores * bpc * tm != rows)

        kernel = functools.partial(
            _focal_reduce_kernel, alpha=float(alpha), gamma=float(gamma),
            rows=rows, tm=tm, bpc=bpc, mask_rows=mask_rows)
        partials = pl.pallas_call(
            kernel,
            out_shape=jax.ShapeDtypeStruct((ncores, 1), jnp.float32),
            grid_spec=pltpu.PrefetchScalarGridSpec(
                num_scalar_prefetch=0,
                grid=(ncores, bpc),
                in_specs=[
                    pl.BlockSpec((tm, LANES), idx_map),
                    pl.BlockSpec((tm, LANES), idx_map),
                ],
                out_specs=pl.BlockSpec((1, 1), lambda c, i: (c, 0),
                                       memory_space=pltpu.SMEM),
                scratch_shapes=[pltpu.VMEM((tm, LANES), jnp.float32)],
            ),
            compiler_params=pltpu.CompilerParams(
                dimension_semantics=("parallel", "arbitrary")),
            cost_estimate=pl.CostEstimate(
                flops=12 * n, transcendentals=3 * n,
                bytes_accessed=n * in_bytes + ncores * 4),
        )(x, t)
        total = jnp.sum(partials)
        if reduction == "mean":
            return total / jnp.float32(n)
        return total
    else:  # reduction == 'none'
        kernel = functools.partial(
            _focal_none_kernel, alpha=float(alpha), gamma=float(gamma))
        out = pl.pallas_call(
            kernel,
            out_shape=jax.ShapeDtypeStruct((rows, LANES), inputs.dtype),
            grid_spec=pltpu.PrefetchScalarGridSpec(
                num_scalar_prefetch=0,
                grid=(nblocks,),
                in_specs=[
                    pl.BlockSpec((tm, LANES), lambda i: (i, 0)),
                    pl.BlockSpec((tm, LANES), lambda i: (i, 0)),
                ],
                out_specs=pl.BlockSpec((tm, LANES), lambda i: (i, 0)),
            ),
            compiler_params=pltpu.CompilerParams(
                dimension_semantics=("parallel",)),
            cost_estimate=pl.CostEstimate(
                flops=12 * n, transcendentals=3 * n,
                bytes_accessed=n * (in_bytes + inputs.dtype.itemsize)),
        )(x, t)
        if pad:
            return out.reshape(-1)[:n].reshape(orig_shape)
        return out.reshape(orig_shape)


def _reference_focal_loss(inputs, targets, alpha=1.0, gamma=2.0,
                          reduction="mean"):
    x = inputs.astype(jnp.float32)
    t = targets.astype(jnp.float32)
    bce = jnp.maximum(x, 0.0) - x * t + jnp.log1p(jnp.exp(-jnp.abs(x)))
    pt = jnp.exp(-bce)
    focal = alpha * (1.0 - pt) ** gamma * bce
    if reduction == "mean":
        return focal.mean()
    elif reduction == "sum":
        return focal.sum()
    return focal


if __name__ == "__main__":
    key = jax.random.PRNGKey(0)
    k1, k2, k3, k4 = jax.random.split(key, 4)

    # Small NCHW-like shape (focal loss is elementwise, shape-agnostic).
    shape = (2, 4, 16, 16)
    inputs = jax.random.normal(k1, shape, dtype=jnp.float32)             # logits
    targets = jax.random.bernoulli(k2, 0.3, shape).astype(jnp.float32)   # 0/1

    out = jax.block_until_ready(
        focal_loss(inputs, targets, alpha=1.0, gamma=2.0, reduction="mean"))
    ref = _reference_focal_loss(inputs, targets, 1.0, 2.0, "mean")
    assert jnp.allclose(out, ref, rtol=1e-5, atol=1e-6), (out, ref)

    out_sum = jax.block_until_ready(
        focal_loss(inputs, targets, reduction="sum"))
    ref_sum = _reference_focal_loss(inputs, targets, reduction="sum")
    assert jnp.allclose(out_sum, ref_sum, rtol=1e-5, atol=1e-5), (out_sum, ref_sum)

    out_none = jax.block_until_ready(
        focal_loss(inputs, targets, reduction="none"))
    ref_none = _reference_focal_loss(inputs, targets, reduction="none")
    assert out_none.shape == shape
    assert jnp.allclose(out_none, ref_none, rtol=1e-5, atol=1e-6)

    # Exercises the in-kernel tail-row masking (rows = 13, not a sublane mult).
    shape2 = (13, 128)
    inp2 = jax.random.normal(k3, shape2, dtype=jnp.float32)
    tgt2 = jax.random.bernoulli(k4, 0.5, shape2).astype(jnp.float32)
    out2 = jax.block_until_ready(focal_loss(inp2, tgt2, reduction="mean"))
    ref2 = _reference_focal_loss(inp2, tgt2, reduction="mean")
    assert jnp.allclose(out2, ref2, rtol=1e-5, atol=1e-6), (out2, ref2)
    out2n = jax.block_until_ready(focal_loss(inp2, tgt2, reduction="none"))
    ref2n = _reference_focal_loss(inp2, tgt2, reduction="none")
    assert jnp.allclose(out2n, ref2n, rtol=1e-5, atol=1e-6)

    # Exercises the n % 128 != 0 padding fallback.
    shape3 = (3, 5, 7, 11)  # n = 1155
    inp3 = jax.random.normal(k1, shape3, dtype=jnp.float32)
    tgt3 = jax.random.bernoulli(k2, 0.3, shape3).astype(jnp.float32)
    out3 = jax.block_until_ready(focal_loss(inp3, tgt3, reduction="sum"))
    ref3 = _reference_focal_loss(inp3, tgt3, reduction="sum")
    assert jnp.allclose(out3, ref3, rtol=1e-5, atol=1e-5), (out3, ref3)

    print("KERNEL_OK")
</pallas_src>

<mosaic_0001>
module attributes {stable_mosaic.version = 11 : i64} {
  func.func @_focal_reduce_kernel(%arg0: i32, %arg1: i32, %arg2: memref<16x128xf32, #tpu.memory_space<vmem>>, %arg3: memref<16x128xf32, #tpu.memory_space<vmem>>, %arg4: memref<1x1xf32, #tpu.memory_space<smem>>, %arg5: memref<16x128xf32, #tpu.memory_space<vmem>>) attributes {dimension_semantics = [#tpu.dimension_semantics<parallel>, #tpu.dimension_semantics<arbitrary>], iteration_bounds = array<i64: 1, 1>, scalar_prefetch = 0 : i64, scratch_operands = 1 : i64, tpu.core_type = #tpu.core_type<tc>, window_params = [{transform_indices = @transform_0, window_bounds = array<i64: 16, 128>}, {transform_indices = @transform_1, window_bounds = array<i64: 16, 128>}, {transform_indices = @transform_2, window_bounds = array<i64: 1, 1>}]} {
    %c0_i32 = arith.constant 0 : i32
    %0 = arith.cmpi eq, %arg1, %c0_i32 : i32
    %1 = arith.extui %0 : i1 to i32
    %c0_i32_0 = arith.constant 0 : i32
    %2 = arith.cmpi ne, %1, %c0_i32_0 : i32
    scf.if %2 {
      %cst_14 = arith.constant 0.000000e+00 : f32
      %30 = vector.broadcast %cst_14 : f32 to vector<16x128xf32>
      %c0_15 = arith.constant 0 : index
      %c0_16 = arith.constant 0 : index
      %31 = vector.load %arg5[%c0_15, %c0_16] : memref<16x128xf32, #tpu.memory_space<vmem>>, vector<16x128xf32>
      tpu.vector_store %arg5[%c0_15, %c0_16], %30 {strides = array<i32>} : memref<16x128xf32, #tpu.memory_space<vmem>>, vector<16x128xf32>,
    } else {
    }
    %c0 = arith.constant 0 : index
    %c0_1 = arith.constant 0 : index
    %3 = vector.load %arg2[%c0, %c0_1] : memref<16x128xf32, #tpu.memory_space<vmem>>, vector<16x128xf32>
    %c0_2 = arith.constant 0 : index
    %c0_3 = arith.constant 0 : index
    %4 = vector.load %arg3[%c0_2, %c0_3] : memref<16x128xf32, #tpu.memory_space<vmem>>, vector<16x128xf32>
    %5 = math.absf %3 : vector<16x128xf32>
    %cst = arith.constant 0.000000e+00 : f32
    %6 = vector.broadcast %cst : f32 to vector<16x128xf32>
    %7 = arith.subf %6, %5 : vector<16x128xf32>
    %8 = math.exp %7 : vector<16x128xf32>
    %cst_4 = arith.constant 0.000000e+00 : f32
    %9 = vector.broadcast %cst_4 : f32 to vector<16x128xf32>
    %10 = arith.maximumf %3, %9 : vector<16x128xf32>
    %11 = arith.mulf %3, %4 : vector<16x128xf32>
    %12 = arith.subf %10, %11 : vector<16x128xf32>
    %13 = math.log1p %8 : vector<16x128xf32>
    %14 = arith.addf %12, %13 : vector<16x128xf32>
    %cst_5 = arith.constant 0.000000e+00 : f32
    %15 = vector.broadcast %cst_5 : f32 to vector<16x128xf32>
    %16 = arith.subf %15, %14 : vector<16x128xf32>
    %17 = math.exp %16 : vector<16x128xf32>
    %cst_6 = arith.constant 1.000000e+00 : f32
    %18 = vector.broadcast %cst_6 : f32 to vector<16x128xf32>
    %19 = arith.subf %18, %17 : vector<16x128xf32>
    %20 = arith.mulf %19, %19 : vector<16x128xf32>
    %cst_7 = arith.constant 1.000000e+00 : f32
    %21 = vector.broadcast %cst_7 : f32 to vector<16x128xf32>
    %22 = arith.mulf %21, %20 : vector<16x128xf32>
    %23 = arith.mulf %22, %14 : vector<16x128xf32>
    %c0_8 = arith.constant 0 : index
    %c0_9 = arith.constant 0 : index
    %24 = vector.load %arg5[%c0_8, %c0_9] : memref<16x128xf32, #tpu.memory_space<vmem>>, vector<16x128xf32>
    %25 = arith.addf %24, %23 : vector<16x128xf32>
    %c0_10 = arith.constant 0 : index
    %c0_11 = arith.constant 0 : index
    %26 = vector.load %arg5[%c0_10, %c0_11] : memref<16x128xf32, #tpu.memory_space<vmem>>, vector<16x128xf32>
    tpu.vector_store %arg5[%c0_10, %c0_11], %25 {strides = array<i32>} : memref<16x128xf32, #tpu.memory_space<vmem>>, vector<16x128xf32>,
    %c0_i32_12 = arith.constant 0 : i32
    %27 = arith.cmpi eq, %arg1, %c0_i32_12 : i32
    %28 = arith.extui %27 : i1 to i32
    %c0_i32_13 = arith.constant 0 : i32
    %29 = arith.cmpi ne, %28, %c0_i32_13 : i32
    scf.if %29 {
      %c0_14 = arith.constant 0 : index
      %c0_15 = arith.constant 0 : index
      %30 = vector.load %arg5[%c0_14, %c0_15] : memref<16x128xf32, #tpu.memory_space<vmem>>, vector<16x128xf32>
      %31 = vector.shape_cast %30 : vector<16x128xf32> to vector<1x16x128xf32>
      %cst_16 = arith.constant dense<0.000000e+00> : vector<1xf32>
      %32 = vector.multi_reduction <add>, %31, %cst_16 [1, 2] : vector<1x16x128xf32> to vector<1xf32>
      %33 = vector.shape_cast %32 : vector<1xf32> to vector<1x1x1xf32>
      %34 = vector.extract %33[0, 0, 0] : f32 from vector<1x1x1xf32>
      %c0_17 = arith.constant 0 : index
      %c0_18 = arith.constant 0 : index
      %35 = memref.load %arg4[%c0_17, %c0_18] : memref<1x1xf32, #tpu.memory_space<smem>>
      memref.store %34, %arg4[%c0_17, %c0_18] : memref<1x1xf32, #tpu.memory_space<smem>>
    } else {
    }
    return
  }
  func.func @transform_0(%arg0: i32, %arg1: i32) -> (i32, i32) {
    %c1_i32 = arith.constant 1 : i32
    %0 = arith.muli %arg0, %c1_i32 : i32
    %1 = arith.addi %0, %arg1 : i32
    %c0_i32 = arith.constant 0 : i32
    %c0_i32_0 = arith.constant 0 : i32
    return %1, %c0_i32 : i32, i32
  }
  func.func @transform_1(%arg0: i32, %arg1: i32) -> (i32, i32) {
    %c1_i32 = arith.constant 1 : i32
    %0 = arith.muli %arg0, %c1_i32 : i32
    %1 = arith.addi %0, %arg1 : i32
    %c0_i32 = arith.constant 0 : i32
    %c0_i32_0 = arith.constant 0 : i32
    return %1, %c0_i32 : i32, i32
  }
  func.func @transform_2(%arg0: i32, %arg1: i32) -> (i32, i32) {
    %c0_i32 = arith.constant 0 : i32
    %c0_i32_0 = arith.constant 0 : i32
    return %arg0, %c0_i32 : i32, i32
  }
}

</mosaic_0001>

<llo_original>
// kernel: tpu_custom_call.1
$region0: #{tpu_custom_call.1}
  #allocation0 [shape = 'u32[]', space=smem, size = 0x4, offset = 0x4, fixed_abs, tag = 'smem constant byte address 0x4 - core index']
  #allocation1 [shape = 'u32[72,128]{1,0:T(1,128)}', space=vmem, size = 0x9000, scoped, tag = 'internal scratch']
  #allocation2 [shape = 'f32[16,128]{1,0:T(8,128)}', space=vmem, size = 0x2000, scoped, tag = 'scratch operand']
  %s0 = inlined_call_operand.hbm [shape: f32[16,128], index: 0, kind: input, shape index: {}]
  %s1 = inlined_call_operand.hbm [shape: f32[16,128], index: 1, kind: input, shape index: {}]
  %s2 = inlined_call_operand.hbm [shape: f32[1,1], index: 2, kind: output, shape index: {}]
  %s3 = sld [smem:[#allocation0]]
  $region34: #{tpu_custom_call.1} parent=0
    _
  %s5 = ssub.s32 1, %s3
  %s6 = scalar_select 0, %s5, %s3
  $region1: #{tpu_custom_call.1} parent=0
    #allocation3 [shape = 'u8[8192]{0}', space=vmem, size = 0x2000, scoped, tag = 'input window, operand 0, single buffered']
    #allocation4 [shape = 's32[1]{0}', space=sflag, size = 0x4, scoped, tag = 'scoped memory for tpu_custom_call.1']
    #allocation5 [shape = 's32[1]{0}', space=sflag, size = 0x4, scoped, tag = 'scoped memory for tpu_custom_call.1']
    #allocation6 [shape = 'u8[8192]{0}', space=vmem, size = 0x2000, scoped, tag = 'input window, operand 1, single buffered']
    #allocation7 [shape = 's32[1]{0}', space=sflag, size = 0x4, scoped, tag = 'scoped memory for tpu_custom_call.1']
    #allocation8 [shape = 'u8[512]{0}', space=smem, size = 0x200, scoped, tag = 'output window, operand 0, single buffered']
    %7 = vsyncpa [#allocation4], 0
    %8 = vsyncpa [#allocation7], 0
    %9 = vsyncpa [#allocation5], 0
    // Predicated region
    $region2: #{tpu_custom_call.1} parent=1 // pred_check
      _
    $region3: #{tpu_custom_call.1} parent=1 // pred_check_branch
      %11 = sbr.rel (0) target = $region5
    $region4: #{tpu_custom_call.1} parent=1 // pred_region
      %s12 = sadd.s32 0, 0
      %s13 = smul.u32 2, %s12
      %15 = vsyncadd [#allocation4], 0
      %s16 = smul.addr %s13, 8
      %s17 = scalar_lea.hbm %s0, %s16
      %s18 = sshll.u32 %s17, 4
      %s19 = int_to_ptr.hbm [resolvable:$true] %s18
      %s20 = sshll.u32 [#allocation3], 4
      %s21 = int_to_ptr.vmem [resolvable:$true] %s20
      %26 = dma.hbm_to_vmem [thread:$0]  %s19, 256, %s21, [#allocation4], 128, 128, 8
    $region5: #{tpu_custom_call.1} parent=1 // pred_fallthru
      _
    // Predicated region
    $region6: #{tpu_custom_call.1} parent=1 // pred_check
      _
    $region7: #{tpu_custom_call.1} parent=1 // pred_check_branch
      %28 = sbr.rel (0) target = $region9
    $region8: #{tpu_custom_call.1} parent=1 // pred_region
      %s29 = sadd.s32 0, 0
      %s30 = smul.u32 2, %s29
      %32 = vsyncadd [#allocation7], 0
      %s33 = smul.addr %s30, 8
      %s34 = scalar_lea.hbm %s1, %s33
      %s35 = sshll.u32 %s34, 4
      %s36 = int_to_ptr.hbm [resolvable:$true] %s35
      %s37 = sshll.u32 [#allocation6], 4
      %s38 = int_to_ptr.vmem [resolvable:$true] %s37
      %43 = dma.hbm_to_vmem [thread:$0]  %s36, 256, %s38, [#allocation7], 128, 128, 8
    $region9: #{tpu_custom_call.1} parent=1 // pred_fallthru
      _
    // Predicated region
    $region10: #{tpu_custom_call.1} parent=1 // pred_check
      _
    $region11: #{tpu_custom_call.1} parent=1 // pred_check_branch
      %45 = sbr.rel (0) target = $region13
    $region12: #{tpu_custom_call.1} parent=1 // pred_region
      %47 = dma.done [#allocation4], 256
    $region13: #{tpu_custom_call.1} parent=1 // pred_fallthru
      _
    // Predicated region
    $region14: #{tpu_custom_call.1} parent=1 // pred_check
      _
    $region15: #{tpu_custom_call.1} parent=1 // pred_check_branch
      %49 = sbr.rel (0) target = $region17
    $region16: #{tpu_custom_call.1} parent=1 // pred_region
      %51 = dma.done [#allocation7], 256
    $region17: #{tpu_custom_call.1} parent=1 // pred_fallthru
      _
    %s52 = sadd.s32 0, 0
    %s53 = smul.u32 2, %s52
    %s54 = sadd.s32 0, 0
    %s55 = smul.u32 2, %s54
    %p56 = scmp.eq.s32.totalorder 0, 0
    // Predicated region
    $region18: #{tpu_custom_call.1} parent=1 // pred_check
      %p57 = pneg %p56
    $region19: #{tpu_custom_call.1} parent=1 // pred_check_branch
      %59 = sbr.rel (%p57) target = $region21
    $region20: #{tpu_custom_call.1} parent=1 // pred_region
      %60 = vst [vmem:[#allocation2] sm:$0xff] 0.0
      %61 = vst [vmem:[#allocation2 + $0x8] sm:$0xff] 0.0
    $region21: #{tpu_custom_call.1} parent=1 // pred_fallthru
      _
    %v62 = vld [vmem:[#allocation3] sm:$0xff]
    %v63 = vld [vmem:[#allocation3 + $0x8] sm:$0xff]
    %v64 = vld [vmem:[#allocation6] sm:$0xff]
    %v65 = vld [vmem:[#allocation6 + $0x8] sm:$0xff]
    %v66 = vand.u32 2147483647, %v62
    %v67 = vand.u32 2147483647, %v63
    %v68 = vsub.f32 0.0, %v66
    %v69 = vsub.f32 0.0, %v67
    %v70 = vmul.f32 %v68, 1.442695
    %v71 = vpow.pop %v70
    %v72 = vmul.f32 %v69, 1.442695
    %v73 = vpow.pop %v72
    %v74 = vmax.f32 %v62, 0.0
    %v75 = vmax.f32 %v63, 0.0
    %v76 = vmul.f32 %v62, %v64
    %v77 = vmul.f32 %v63, %v65
    %v78 = vsub.f32 %v74, %v76
    %v79 = vsub.f32 %v75, %v77
    %v80 = vadd.f32 %v71, 1.0
    %v81 = vlog2.pop %v80
    %v82 = vmul.f32 %v81, 0.6931472
    %v83 = vmul.f32 -0.5, %v71
    %v84 = vadd.f32 %v83, 1.0
    %v85 = vmul.f32 %v84, %v71
    %v86 = vand.u32 2147483647, %v71
    %vm87 = vcmp.lt.f32.partialorder %v86, 0.0004427343
    %v88 = vsel %vm87, %v85, %v82
    %v89 = vadd.f32 %v73, 1.0
    %v90 = vlog2.pop %v89
    %v91 = vmul.f32 %v90, 0.6931472
    %v92 = vmul.f32 -0.5, %v73
    %v93 = vadd.f32 %v92, 1.0
    %v94 = vmul.f32 %v93, %v73
    %v95 = vand.u32 2147483647, %v73
    %vm96 = vcmp.lt.f32.partialorder %v95, 0.0004427343
    %v97 = vsel %vm96, %v94, %v91
    %v98 = vadd.f32 %v78, %v88
    %v99 = vadd.f32 %v79, %v97
    %v100 = vsub.f32 0.0, %v98
    %v101 = vsub.f32 0.0, %v99
    %v102 = vmul.f32 %v100, 1.442695
    %v103 = vpow.pop %v102
    %v104 = vmul.f32 %v101, 1.442695
    %v105 = vpow.pop %v104
    %v106 = vsub.f32 1.0, %v103
    %v107 = vsub.f32 1.0, %v105
    %v108 = vmul.f32 %v106, %v106
    %v109 = vmul.f32 %v107, %v107
    %v110 = vmul.f32 %v108, %v98
    %v111 = vmul.f32 %v109, %v99
    %v112 = vld [vmem:[#allocation2] sm:$0xff]
    %v113 = vld [vmem:[#allocation2 + $0x8] sm:$0xff]
    %v114 = vadd.f32 %v112, %v110
    %v115 = vadd.f32 %v113, %v111
    %116 = vst [vmem:[#allocation2] sm:$0xff] %v114
    %117 = vst [vmem:[#allocation2 + $0x8] sm:$0xff] %v115
    // Predicated region
    $region22: #{tpu_custom_call.1} parent=1 // pred_check
      %p118 = pneg %p56
    $region23: #{tpu_custom_call.1} parent=1 // pred_check_branch
      %120 = sbr.rel (%p118) target = $region25
    $region24: #{tpu_custom_call.1} parent=1 // pred_region
      %v121 = vld [vmem:[#allocation2] sm:$0xff]
      %v122 = vld [vmem:[#allocation2 + $0x8] sm:$0xff]
      %v123 = vadd.f32 %v121, %v122
      %124 = vadd.xlane.f32.xlu0 %v123
      %v125 = vpop.xlane.xlu0 %124
      %v126 = vrot.slane %v125, 4
      %v127 = vadd.f32 %v125, %v126
      %v128 = vrot.slane %v127, 2
      %v129 = vadd.f32 %v127, %v128
      %v130 = vrot.slane %v129, 1
      %v131 = vadd.f32 %v129, %v130
      %s132 = vtos %v131
      %s133 = scalar_lea.smem [#allocation8], 0
      %134 = sst [smem:[%s133]] %s132
    $region25: #{tpu_custom_call.1} parent=1 // pred_fallthru
      _
    // Predicated region
    $region26: #{tpu_custom_call.1} parent=1 // pred_check
      _
    $region27: #{tpu_custom_call.1} parent=1 // pred_check_branch
      %136 = sbr.rel (0) target = $region29
    $region28: #{tpu_custom_call.1} parent=1 // pred_region
      %138 = vsyncadd [#allocation5], 0
      %s140 = sshll.u32 %s2, 4
      %s141 = int_to_ptr.hbm [resolvable:$true] %s140
      %143 = dma.smem_to_hbm [#allocation8], 16, %s141, [#allocation5]
    $region29: #{tpu_custom_call.1} parent=1 // pred_fallthru
      _
    // Predicated region
    $region30: #{tpu_custom_call.1} parent=1 // pred_check
      _
    $region31: #{tpu_custom_call.1} parent=1 // pred_check_branch
      %145 = sbr.rel (0) target = $region33
    $region32: #{tpu_custom_call.1} parent=1 // pred_region
      %147 = dma.done [#allocation5], 16
    $region33: #{tpu_custom_call.1} parent=1 // pred_fallthru
      _
    %148 = sfence
    %149 = vsyncpa [#allocation4], 1
    %150 = vsyncpa [#allocation7], 1
    %151 = vsyncpa [#allocation5], 1

</llo_original>
